<compile_context>
chip_gen: v6e
topology: v6e:2x2x1
jax: 0.10.0
libtpu: 0.0.40
codegen_flags: <defaults>
</compile_context>

<pallas_src>
import functools

import jax
import jax.numpy as jnp
from jax import lax
from jax.experimental import pallas as pl
from jax.experimental.pallas import tpu as pltpu


def _round_up(a, m):
    return (a + m - 1) // m * m


def _legacy_softmax_dim(ndim):
    # torch.nn.functional._get_softmax_dim (legacy implicit-dim rule)
    return 0 if ndim in (0, 1, 3) else 1


# ---------------------------------------------------------------------------
# Pallas kernel: fused log_softmax(x), log_softmax(y), KLDivLoss pointwise,
# per-row sum.  One grid step = one independent block of rows.
# ---------------------------------------------------------------------------
def _kl_rows_kernel(x_ref, y_ref, o_ref, *, n_rows, softmax_target, mask_rows):
    bm = x_ref.shape[0]

    x = x_ref[...].astype(jnp.float32)
    y = y_ref[...].astype(jnp.float32)

    if mask_rows:
        # Ragged last block: OOB rows hold unspecified data; select them away
        # before any arithmetic (static flag -> zero cost when not needed).
        row_ids = pl.program_id(0) * bm + lax.broadcasted_iota(
            jnp.int32, (bm, 1), 0)
        valid = row_ids < n_rows
        x = jnp.where(valid, x, 0.0)
        y = jnp.where(valid, y, 0.0)

    def _log_softmax(v):
        m = jnp.max(v, axis=-1, keepdims=True)
        z = v - m
        return z - jnp.log(jnp.sum(jnp.exp(z), axis=-1, keepdims=True))

    s = _log_softmax(x)        # KLDivLoss "input" (log-probabilities)
    y_ls = _log_softmax(y)

    if softmax_target:
        # Proper-KL self-check path: target is a probability distribution,
        # log(target) == y_ls (no extra EUP log needed).
        tgt = jnp.exp(y_ls)
        log_tgt = y_ls
    else:
        # Module-faithful path: target is itself log_softmax(y).
        tgt = y_ls
        log_tgt = jnp.log(jnp.where(tgt > 0, tgt, 1.0))   # safe log; masked below

    # PyTorch KLDivLoss pointwise with the target>0 guard (THNN semantics).
    pw = jnp.where(tgt > 0, tgt * (log_tgt - s), 0.0)

    row_kl = jnp.sum(pw, axis=-1, keepdims=True)           # (bm, 1)
    if mask_rows:
        row_kl = jnp.where(valid, row_kl, 0.0)
    o_ref[...] = row_kl


def _fused_kl_rows(x2, y2, *, softmax_target, block_rows=None):
    """x2, y2: (N, C) logits.  Returns (N, 1) per-row sums of the pointwise loss."""
    N, C = x2.shape

    if block_rows is None:
        # Largest row tile whose double-buffered x/y blocks stay well below the
        # scoped-VMEM default on every chip:
        #   2 inputs * 2 buffers * bm * C * 4B  <= ~8 MiB.
        budget = 8 * 1024 * 1024
        bm = max(8, min(1024, budget // max(1, 4 * 4 * C)))
        bm = min(bm, _round_up(N, 8))
    else:
        bm = block_rows
    bm = max(8, _round_up(bm, 8))

    grid = pl.cdiv(N, bm)
    mask_rows = (grid * bm) != N
    kernel = functools.partial(
        _kl_rows_kernel, n_rows=N, softmax_target=softmax_target,
        mask_rows=mask_rows)

    return pl.pallas_call(
        kernel,
        out_shape=jax.ShapeDtypeStruct((N, 1), jnp.float32),
        grid_spec=pl.GridSpec(
            grid=(grid,),
            in_specs=[pl.BlockSpec((bm, C), lambda i: (i, 0)),
                      pl.BlockSpec((bm, C), lambda i: (i, 0))],
            out_specs=pl.BlockSpec((bm, 1), lambda i: (i, 0))),
        compiler_params=pltpu.CompilerParams(
            dimension_semantics=("parallel",)),
    )(x2, y2)


# ---------------------------------------------------------------------------
# Public wrappers
# ---------------------------------------------------------------------------
def kl_div_from_logits(x, y, *, softmax_target, reduction="mean", block_rows=None):
    assert x.shape == y.shape, (x.shape, y.shape)
    dim = _legacy_softmax_dim(x.ndim)
    if x.ndim <= 1:
        x2 = x.reshape(1, -1)
        y2 = y.reshape(1, -1)
    else:
        xm = jnp.moveaxis(x, dim, -1)
        ym = jnp.moveaxis(y, dim, -1)
        x2 = xm.reshape(-1, xm.shape[-1])
        y2 = ym.reshape(-1, ym.shape[-1])

    row_sums = _fused_kl_rows(
        x2, y2, softmax_target=softmax_target, block_rows=block_rows)
    total = jnp.sum(row_sums)          # O(N) finalize; negligible HBM traffic
    if reduction == "mean":
        return total / x.size
    if reduction == "sum":
        return total
    raise NotImplementedError(
        f"reduction={reduction!r} not implemented (module default is 'mean')")


def kl_divergence(x, y, *, reduction="mean", block_rows=None):
    """Faithful port of the PyTorch KLDivergence module forward:
    KLDivLoss(reduction)(log_softmax(x), log_softmax(y))."""
    return kl_div_from_logits(
        x, y, softmax_target=False, reduction=reduction, block_rows=block_rows)


# ---------------------------------------------------------------------------
# Pure-JAX references (correctness check only)
# ---------------------------------------------------------------------------
def _log_softmax_ref(v, axis):
    m = jnp.max(v, axis=axis, keepdims=True)
    z = v - m
    return z - jnp.log(jnp.sum(jnp.exp(z), axis=axis, keepdims=True))


def _kl_div_loss_mean_ref(input_logp, target):
    safe = jnp.where(target > 0, target, 1.0)
    pw = jnp.where(target > 0, target * (jnp.log(safe) - input_logp), 0.0)
    return jnp.mean(pw)


def kl_divergence_reference(x, y):
    dim = _legacy_softmax_dim(x.ndim)
    return _kl_div_loss_mean_ref(_log_softmax_ref(x, dim), _log_softmax_ref(y, dim))


def kl_div_prob_target_reference(x, y):
    dim = _legacy_softmax_dim(x.ndim)
    return _kl_div_loss_mean_ref(_log_softmax_ref(x, dim),
                                 jnp.exp(_log_softmax_ref(y, dim)))


if __name__ == "__main__":
    key = jax.random.PRNGKey(0)
    kx, ky, kx4, ky4 = jax.random.split(key, 4)

    # --- 2-D logits (canonical usage): N=50 rows, C=100 classes -------------
    N, C = 50, 100
    x = jax.random.normal(kx, (N, C), jnp.float32)
    y = 0.5 * jax.random.normal(ky, (N, C), jnp.float32) + 0.1

    # 1) Module-faithful forward (log_softmax applied to BOTH args, as in torch).
    out = jax.block_until_ready(kl_divergence(x, y))
    ref = kl_divergence_reference(x, y)
    assert out.shape == () and ref.shape == (), (out.shape, ref.shape)
    assert bool(jnp.isfinite(out)), float(out)
    assert jnp.allclose(out, ref, atol=1e-6, rtol=1e-6), (float(out), float(ref))

    # Same result with small row blocks (exercises multi-block grid + the
    # masked ragged last block).
    out_b = jax.block_until_ready(kl_divergence(x, y, block_rows=16))
    assert jnp.allclose(out_b, ref, atol=1e-6, rtol=1e-6), (float(out_b), float(ref))

    # 2) Non-degenerate self-check of the same fused kernel: proper KL with a
    #    probability target (softmax(y)) verifies log-softmax + pointwise +
    #    reduction math on real numbers.
    out_p = jax.block_until_ready(
        kl_div_from_logits(x, y, softmax_target=True, block_rows=16))
    ref_p = kl_div_prob_target_reference(x, y)
    assert bool(jnp.isfinite(out_p)) and float(out_p) > 0.0, float(out_p)
    assert jnp.allclose(out_p, ref_p, atol=2e-5, rtol=2e-5), (float(out_p), float(ref_p))

    # --- 4-D logits (legacy implicit dim = 1, channel axis) ------------------
    x4 = jax.random.normal(kx4, (2, 4, 16, 16), jnp.float32)
    y4 = 0.5 * jax.random.normal(ky4, (2, 4, 16, 16), jnp.float32) + 0.1

    out4 = jax.block_until_ready(kl_divergence(x4, y4))
    ref4 = kl_divergence_reference(x4, y4)
    assert bool(jnp.isfinite(out4)), float(out4)
    assert jnp.allclose(out4, ref4, atol=1e-6, rtol=1e-6), (float(out4), float(ref4))

    out4_p = jax.block_until_ready(
        kl_div_from_logits(x4, y4, softmax_target=True))
    ref4_p = kl_div_prob_target_reference(x4, y4)
    assert bool(jnp.isfinite(out4_p)) and float(out4_p) > 0.0, float(out4_p)
    assert jnp.allclose(out4_p, ref4_p, atol=2e-5, rtol=2e-5), (
        float(out4_p), float(ref4_p))

    print("KERNEL_OK")
</pallas_src>

<mosaic_0001>
module attributes {stable_mosaic.version = 11 : i64} {
  func.func @_kl_rows_kernel(%arg0: i32, %arg1: memref<56x100xf32, #tpu.memory_space<vmem>>, %arg2: memref<56x100xf32, #tpu.memory_space<vmem>>, %arg3: memref<56x1xf32, #tpu.memory_space<vmem>>) attributes {dimension_semantics = [#tpu.dimension_semantics<parallel>], iteration_bounds = array<i64: 1>, scalar_prefetch = 0 : i64, scratch_operands = 0 : i64, tpu.core_type = #tpu.core_type<tc>, window_params = [{transform_indices = @transform_0, window_bounds = array<i64: 56, 100>}, {transform_indices = @transform_1, window_bounds = array<i64: 56, 100>}, {transform_indices = @transform_2, window_bounds = array<i64: 56, 1>}]} {
    %c0 = arith.constant 0 : index
    %c0_0 = arith.constant 0 : index
    %0 = vector.load %arg1[%c0, %c0_0] : memref<56x100xf32, #tpu.memory_space<vmem>>, vector<56x100xf32>
    %c0_1 = arith.constant 0 : index
    %c0_2 = arith.constant 0 : index
    %1 = vector.load %arg2[%c0_1, %c0_2] : memref<56x100xf32, #tpu.memory_space<vmem>>, vector<56x100xf32>
    %c56_i32 = arith.constant 56 : i32
    %2 = arith.muli %arg0, %c56_i32 : i32
    %3 = tpu.iota {dimensions = array<i32: 0>} : vector<56x1xi32>
    %4 = vector.broadcast %2 : i32 to vector<56x1xi32>
    %5 = arith.addi %4, %3 : vector<56x1xi32>
    %c50_i32 = arith.constant 50 : i32
    %6 = vector.broadcast %c50_i32 : i32 to vector<56x1xi32>
    %7 = arith.cmpi slt, %5, %6 : vector<56x1xi32>
    %cst = arith.constant 0.000000e+00 : f32
    %8 = vector.shape_cast %7 : vector<56x1xi1> to vector<56x1xi1>
    %9 = vector.broadcast %8 : vector<56x1xi1> to vector<56x100xi1>
    %10 = vector.broadcast %cst : f32 to vector<56x100xf32>
    %11 = arith.select %9, %0, %10 : vector<56x100xi1>, vector<56x100xf32>
    %cst_3 = arith.constant 0.000000e+00 : f32
    %12 = vector.shape_cast %7 : vector<56x1xi1> to vector<56x1xi1>
    %13 = vector.broadcast %12 : vector<56x1xi1> to vector<56x100xi1>
    %14 = vector.broadcast %cst_3 : f32 to vector<56x100xf32>
    %15 = arith.select %13, %1, %14 : vector<56x100xi1>, vector<56x100xf32>
    %cst_4 = arith.constant dense<0xFF800000> : vector<56xf32>
    %16 = vector.multi_reduction <maximumf>, %11, %cst_4 [1] : vector<56x100xf32> to vector<56xf32>
    %17 = vector.shape_cast %16 : vector<56xf32> to vector<56x1xf32>
    %18 = vector.broadcast %17 : vector<56x1xf32> to vector<56x100xf32>
    %19 = arith.subf %11, %18 : vector<56x100xf32>
    %20 = math.exp %19 : vector<56x100xf32>
    %cst_5 = arith.constant dense<0.000000e+00> : vector<56xf32>
    %21 = vector.multi_reduction <add>, %20, %cst_5 [1] : vector<56x100xf32> to vector<56xf32>
    %22 = vector.shape_cast %21 : vector<56xf32> to vector<56x1xf32>
    %23 = math.log %22 : vector<56x1xf32>
    %24 = vector.broadcast %23 : vector<56x1xf32> to vector<56x100xf32>
    %25 = arith.subf %19, %24 : vector<56x100xf32>
    %cst_6 = arith.constant dense<0xFF800000> : vector<56xf32>
    %26 = vector.multi_reduction <maximumf>, %15, %cst_6 [1] : vector<56x100xf32> to vector<56xf32>
    %27 = vector.shape_cast %26 : vector<56xf32> to vector<56x1xf32>
    %28 = vector.broadcast %27 : vector<56x1xf32> to vector<56x100xf32>
    %29 = arith.subf %15, %28 : vector<56x100xf32>
    %30 = math.exp %29 : vector<56x100xf32>
    %cst_7 = arith.constant dense<0.000000e+00> : vector<56xf32>
    %31 = vector.multi_reduction <add>, %30, %cst_7 [1] : vector<56x100xf32> to vector<56xf32>
    %32 = vector.shape_cast %31 : vector<56xf32> to vector<56x1xf32>
    %33 = math.log %32 : vector<56x1xf32>
    %34 = vector.broadcast %33 : vector<56x1xf32> to vector<56x100xf32>
    %35 = arith.subf %29, %34 : vector<56x100xf32>
    %cst_8 = arith.constant 0.000000e+00 : f32
    %36 = vector.broadcast %cst_8 : f32 to vector<56x100xf32>
    %37 = arith.cmpf ogt, %35, %36 : vector<56x100xf32>
    %cst_9 = arith.constant 1.000000e+00 : f32
    %38 = vector.broadcast %cst_9 : f32 to vector<56x100xf32>
    %39 = arith.select %37, %35, %38 : vector<56x100xi1>, vector<56x100xf32>
    %40 = math.log %39 : vector<56x100xf32>
    %cst_10 = arith.constant 0.000000e+00 : f32
    %41 = vector.broadcast %cst_10 : f32 to vector<56x100xf32>
    %42 = arith.cmpf ogt, %35, %41 : vector<56x100xf32>
    %43 = arith.subf %40, %25 : vector<56x100xf32>
    %44 = arith.mulf %35, %43 : vector<56x100xf32>
    %cst_11 = arith.constant 0.000000e+00 : f32
    %45 = vector.broadcast %cst_11 : f32 to vector<56x100xf32>
    %46 = arith.select %42, %44, %45 : vector<56x100xi1>, vector<56x100xf32>
    %cst_12 = arith.constant dense<0.000000e+00> : vector<56xf32>
    %47 = vector.multi_reduction <add>, %46, %cst_12 [1] : vector<56x100xf32> to vector<56xf32>
    %48 = vector.shape_cast %47 : vector<56xf32> to vector<56x1xf32>
    %cst_13 = arith.constant 0.000000e+00 : f32
    %49 = vector.broadcast %cst_13 : f32 to vector<56x1xf32>
    %50 = arith.select %7, %48, %49 : vector<56x1xi1>, vector<56x1xf32>
    %c0_14 = arith.constant 0 : index
    %c0_15 = arith.constant 0 : index
    %51 = vector.load %arg3[%c0_14, %c0_15] : memref<56x1xf32, #tpu.memory_space<vmem>>, vector<56x1xf32>
    tpu.vector_store %arg3[%c0_14, %c0_15], %50 {strides = array<i32>} : memref<56x1xf32, #tpu.memory_space<vmem>>, vector<56x1xf32>,
    return
  }
  func.func @transform_0(%arg0: i32) -> (i32, i32) {
    %c0_i32 = arith.constant 0 : i32
    %c0_i32_0 = arith.constant 0 : i32
    return %arg0, %c0_i32 : i32, i32
  }
  func.func @transform_1(%arg0: i32) -> (i32, i32) {
    %c0_i32 = arith.constant 0 : i32
    %c0_i32_0 = arith.constant 0 : i32
    return %arg0, %c0_i32 : i32, i32
  }
  func.func @transform_2(%arg0: i32) -> (i32, i32) {
    %c0_i32 = arith.constant 0 : i32
    %c0_i32_0 = arith.constant 0 : i32
    return %arg0, %c0_i32 : i32, i32
  }
}

</mosaic_0001>

<llo_original>
// kernel: tpu_custom_call.1
$region0: #{tpu_custom_call.1}
  #allocation0 [shape = 'u32[]', space=smem, size = 0x4, offset = 0x4, fixed_abs, tag = 'smem constant byte address 0x4 - core index']
  #allocation1 [shape = 'u32[144,128]{1,0:T(1,128)}', space=vmem, size = 0x12000, scoped, tag = 'internal scratch']
  %s0 = inlined_call_operand.hbm [shape: f32[50,100], index: 0, kind: input, shape index: {}]
  %s1 = inlined_call_operand.hbm [shape: f32[50,100], index: 1, kind: input, shape index: {}]
  %s2 = inlined_call_operand.vmem [shape: f32[50,1], index: 2, kind: output, shape index: {}]
  %s3 = sld [smem:[#allocation0]]
  $region26: #{tpu_custom_call.1} parent=0
    _
  %s5 = ssub.s32 1, %s3
  %s6 = scalar_select 0, %s5, %s3
  $region1: #{tpu_custom_call.1} parent=0
    #allocation2 [shape = 'u8[28672]{0}', space=vmem, size = 0x7000, scoped, tag = 'input window, operand 0, single buffered']
    #allocation3 [shape = 's32[1]{0}', space=sflag, size = 0x4, scoped, tag = 'scoped memory for tpu_custom_call.1']
    #allocation4 [shape = 'u8[28672]{0}', space=vmem, size = 0x7000, scoped, tag = 'input window, operand 1, single buffered']
    #allocation5 [shape = 's32[1]{0}', space=sflag, size = 0x4, scoped, tag = 'scoped memory for tpu_custom_call.1']
    %7 = vsyncpa [#allocation3], 0
    %8 = vsyncpa [#allocation5], 0
    // Predicated region
    $region2: #{tpu_custom_call.1} parent=1 // pred_check
      _
    $region3: #{tpu_custom_call.1} parent=1 // pred_check_branch
      %10 = sbr.rel (0) target = $region5
    $region4: #{tpu_custom_call.1} parent=1 // pred_region
      %s12 = ssub.s32 896, 896
      %13 = vsyncadd [#allocation3], %s12
      %s14 = sshll.u32 [#allocation2], 4
      %s15 = int_to_ptr.vmem [resolvable:$true] %s14
      %20 = dma.hbm_to_vmem [thread:$0]  %s0, 896, %s15, [#allocation3], 128, 128, 8
    $region5: #{tpu_custom_call.1} parent=1 // pred_fallthru
      _
    // Predicated region
    $region6: #{tpu_custom_call.1} parent=1 // pred_check
      _
    $region7: #{tpu_custom_call.1} parent=1 // pred_check_branch
      %22 = sbr.rel (0) target = $region9
    $region8: #{tpu_custom_call.1} parent=1 // pred_region
      %s24 = ssub.s32 896, 896
      %25 = vsyncadd [#allocation5], %s24
      %s26 = sshll.u32 [#allocation4], 4
      %s27 = int_to_ptr.vmem [resolvable:$true] %s26
      %32 = dma.hbm_to_vmem [thread:$0]  %s1, 896, %s27, [#allocation5], 128, 128, 8
    $region9: #{tpu_custom_call.1} parent=1 // pred_fallthru
      _
    // Predicated region
    $region10: #{tpu_custom_call.1} parent=1 // pred_check
      _
    $region11: #{tpu_custom_call.1} parent=1 // pred_check_branch
      %34 = sbr.rel (0) target = $region13
    $region12: #{tpu_custom_call.1} parent=1 // pred_region
      %35 = dma.done [#allocation3], 896
    $region13: #{tpu_custom_call.1} parent=1 // pred_fallthru
      _
    // Predicated region
    $region14: #{tpu_custom_call.1} parent=1 // pred_check
      _
    $region15: #{tpu_custom_call.1} parent=1 // pred_check_branch
      %37 = sbr.rel (0) target = $region17
    $region16: #{tpu_custom_call.1} parent=1 // pred_region
      %38 = dma.done [#allocation5], 896
    $region17: #{tpu_custom_call.1} parent=1 // pred_fallthru
      _
    %v39 = vld [vmem:[#allocation2] sm:$0xff]
    %v40 = vld [vmem:[#allocation2 + $0x8] sm:$0xff]
    %v41 = vld [vmem:[#allocation2 + $0x10] sm:$0xff]
    %v42 = vld [vmem:[#allocation2 + $0x18] sm:$0xff]
    %v43 = vld [vmem:[#allocation2 + $0x20] sm:$0xff]
    %v44 = vld [vmem:[#allocation2 + $0x28] sm:$0xff]
    %v45 = vld [vmem:[#allocation2 + $0x30] sm:$0xff]
    %v46 = vld [vmem:[#allocation4] sm:$0xff]
    %v47 = vld [vmem:[#allocation4 + $0x8] sm:$0xff]
    %v48 = vld [vmem:[#allocation4 + $0x10] sm:$0xff]
    %v49 = vld [vmem:[#allocation4 + $0x18] sm:$0xff]
    %v50 = vld [vmem:[#allocation4 + $0x20] sm:$0xff]
    %v51 = vld [vmem:[#allocation4 + $0x28] sm:$0xff]
    %v52 = vld [vmem:[#allocation4 + $0x30] sm:$0xff]
    %s53 = smul.u32 0, 56
    %v54 = vlaneseq
    %v55 = vshrl.u32 %v54, 7
    %v56 = vadd.s32 %v55, 8
    %v57 = vadd.s32 %v55, 16
    %v58 = vadd.s32 %v55, 24
    %v59 = vadd.s32 %v55, 32
    %v60 = vadd.s32 %v55, 40
    %v61 = vadd.s32 %v55, 48
    %v62 = vstv %s53
    %v63 = vadd.s32 %v62, %v55
    %v64 = vadd.s32 %v62, %v56
    %v65 = vadd.s32 %v62, %v57
    %v66 = vadd.s32 %v62, %v58
    %v67 = vadd.s32 %v62, %v59
    %v68 = vadd.s32 %v62, %v60
    %v69 = vadd.s32 %v62, %v61
    %vm70 = vcmp.lt.s32.totalorder %v63, 50
    %vm71 = vcmp.lt.s32.totalorder %v64, 50
    %vm72 = vcmp.lt.s32.totalorder %v65, 50
    %vm73 = vcmp.lt.s32.totalorder %v66, 50
    %vm74 = vcmp.lt.s32.totalorder %v67, 50
    %vm75 = vcmp.lt.s32.totalorder %v68, 50
    %vm76 = vcmp.lt.s32.totalorder %v69, 50
    %v77 = vsel %vm70, 1, 0
    %v78 = vsel %vm71, 1, 0
    %v79 = vsel %vm72, 1, 0
    %v80 = vsel %vm73, 1, 0
    %v81 = vsel %vm74, 1, 0
    %v82 = vsel %vm75, 1, 0
    %v83 = vsel %vm76, 1, 0
    %vm84 = vcmp.eq.s32.totalorder %v77, 1
    %vm85 = vcmp.eq.s32.totalorder %v78, 1
    %vm86 = vcmp.eq.s32.totalorder %v79, 1
    %vm87 = vcmp.eq.s32.totalorder %v80, 1
    %vm88 = vcmp.eq.s32.totalorder %v81, 1
    %vm89 = vcmp.eq.s32.totalorder %v82, 1
    %vm90 = vcmp.eq.s32.totalorder %v83, 1
    %v91 = vsel %vm84, %v39, 0.0
    %v92 = vsel %vm85, %v40, 0.0
    %v93 = vsel %vm86, %v41, 0.0
    %v94 = vsel %vm87, %v42, 0.0
    %v95 = vsel %vm88, %v43, 0.0
    %v96 = vsel %vm89, %v44, 0.0
    %v97 = vsel %vm90, %v45, 0.0
    %v98 = vsel %vm84, %v46, 0.0
    %v99 = vsel %vm85, %v47, 0.0
    %v100 = vsel %vm86, %v48, 0.0
    %v101 = vsel %vm87, %v49, 0.0
    %v102 = vsel %vm88, %v50, 0.0
    %v103 = vsel %vm89, %v51, 0.0
    %v104 = vsel %vm90, %v52, 0.0
    %vm105 = vcmask 818176
    %v106 = vsel %vm105, %v91, -inf
    %107 = vmax.xlane.f32.xlu0 %v106
    %v108 = vpop.xlane.xlu0 %107
    %v109 = vsel %vm105, %v92, -inf
    %110 = vmax.xlane.f32.xlu0 %v109
    %v111 = vpop.xlane.xlu0 %110
    %v112 = vsel %vm105, %v93, -inf
    %113 = vmax.xlane.f32.xlu0 %v112
    %v114 = vpop.xlane.xlu0 %113
    %v115 = vsel %vm105, %v94, -inf
    %116 = vmax.xlane.f32.xlu0 %v115
    %v117 = vpop.xlane.xlu0 %116
    %v118 = vsel %vm105, %v95, -inf
    %119 = vmax.xlane.f32.xlu0 %v118
    %v120 = vpop.xlane.xlu0 %119
    %v121 = vsel %vm105, %v96, -inf
    %122 = vmax.xlane.f32.xlu0 %v121
    %v123 = vpop.xlane.xlu0 %122
    %v124 = vsel %vm105, %v97, -inf
    %125 = vmax.xlane.f32.xlu0 %v124
    %v126 = vpop.xlane.xlu0 %125
    %v127 = vsub.f32 %v91, %v108
    %v128 = vsub.f32 %v92, %v111
    %v129 = vsub.f32 %v93, %v114
    %v130 = vsub.f32 %v94, %v117
    %v131 = vsub.f32 %v95, %v120
    %v132 = vsub.f32 %v96, %v123
    %v133 = vsub.f32 %v97, %v126
    %v134 = vmul.f32 %v127, 1.442695
    %v135 = vpow.pop %v134
    %v136 = vmul.f32 %v128, 1.442695
    %v137 = vpow.pop %v136
    %v138 = vmul.f32 %v129, 1.442695
    %v139 = vpow.pop %v138
    %v140 = vmul.f32 %v130, 1.442695
    %v141 = vpow.pop %v140
    %v142 = vmul.f32 %v131, 1.442695
    %v143 = vpow.pop %v142
    %v144 = vmul.f32 %v132, 1.442695
    %v145 = vpow.pop %v144
    %v146 = vmul.f32 %v133, 1.442695
    %v147 = vpow.pop %v146
    %v148 = vsel %vm105, %v135, 0.0
    %149 = vadd.xlane.f32.xlu0 %v148
    %v150 = vpop.xlane.xlu0 %149
    %v151 = vsel %vm105, %v137, 0.0
    %152 = vadd.xlane.f32.xlu0 %v151
    %v153 = vpop.xlane.xlu0 %152
    %v154 = vsel %vm105, %v139, 0.0
    %155 = vadd.xlane.f32.xlu0 %v154
    %v156 = vpop.xlane.xlu0 %155
    %v157 = vsel %vm105, %v141, 0.0
    %158 = vadd.xlane.f32.xlu0 %v157
    %v159 = vpop.xlane.xlu0 %158
    %v160 = vsel %vm105, %v143, 0.0
    %161 = vadd.xlane.f32.xlu0 %v160
    %v162 = vpop.xlane.xlu0 %161
    %v163 = vsel %vm105, %v145, 0.0
    %164 = vadd.xlane.f32.xlu0 %v163
    %v165 = vpop.xlane.xlu0 %164
    %v166 = vsel %vm105, %v147, 0.0
    %167 = vadd.xlane.f32.xlu0 %v166
    %v168 = vpop.xlane.xlu0 %167
    %v169 = vlog2.pop %v150
    %v170 = vmul.f32 %v169, 0.6931472
    %v171 = vlog2.pop %v153
    %v172 = vmul.f32 %v171, 0.6931472
    %v173 = vlog2.pop %v156
    %v174 = vmul.f32 %v173, 0.6931472
    %v175 = vlog2.pop %v159
    %v176 = vmul.f32 %v175, 0.6931472
    %v177 = vlog2.pop %v162
    %v178 = vmul.f32 %v177, 0.6931472
    %v179 = vlog2.pop %v165
    %v180 = vmul.f32 %v179, 0.6931472
    %v181 = vlog2.pop %v168
    %v182 = vmul.f32 %v181, 0.6931472
    %v183 = vsub.f32 %v127, %v170
    %v184 = vsub.f32 %v128, %v172
    %v185 = vsub.f32 %v129, %v174
    %v186 = vsub.f32 %v130, %v176
    %v187 = vsub.f32 %v131, %v178
    %v188 = vsub.f32 %v132, %v180
    %v189 = vsub.f32 %v133, %v182
    %v190 = vsel %vm105, %v98, -inf
    %191 = vmax.xlane.f32.xlu0 %v190
    %v192 = vpop.xlane.xlu0 %191
    %v193 = vsel %vm105, %v99, -inf
    %194 = vmax.xlane.f32.xlu0 %v193
    %v195 = vpop.xlane.xlu0 %194
    %v196 = vsel %vm105, %v100, -inf
    %197 = vmax.xlane.f32.xlu0 %v196
    %v198 = vpop.xlane.xlu0 %197
    %v199 = vsel %vm105, %v101, -inf
    %200 = vmax.xlane.f32.xlu0 %v199
    %v201 = vpop.xlane.xlu0 %200
    %v202 = vsel %vm105, %v102, -inf
    %203 = vmax.xlane.f32.xlu0 %v202
    %v204 = vpop.xlane.xlu0 %203
    %v205 = vsel %vm105, %v103, -inf
    %206 = vmax.xlane.f32.xlu0 %v205
    %v207 = vpop.xlane.xlu0 %206
    %v208 = vsel %vm105, %v104, -inf
    %209 = vmax.xlane.f32.xlu0 %v208
    %v210 = vpop.xlane.xlu0 %209
    %v211 = vsub.f32 %v98, %v192
    %v212 = vsub.f32 %v99, %v195
    %v213 = vsub.f32 %v100, %v198
    %v214 = vsub.f32 %v101, %v201
    %v215 = vsub.f32 %v102, %v204
    %v216 = vsub.f32 %v103, %v207
    %v217 = vsub.f32 %v104, %v210
    %v218 = vmul.f32 %v211, 1.442695
    %v219 = vpow.pop %v218
    %v220 = vmul.f32 %v212, 1.442695
    %v221 = vpow.pop %v220
    %v222 = vmul.f32 %v213, 1.442695
    %v223 = vpow.pop %v222
    %v224 = vmul.f32 %v214, 1.442695
    %v225 = vpow.pop %v224
    %v226 = vmul.f32 %v215, 1.442695
    %v227 = vpow.pop %v226
    %v228 = vmul.f32 %v216, 1.442695
    %v229 = vpow.pop %v228
    %v230 = vmul.f32 %v217, 1.442695
    %v231 = vpow.pop %v230
    %v232 = vsel %vm105, %v219, 0.0
    %233 = vadd.xlane.f32.xlu0 %v232
    %v234 = vpop.xlane.xlu0 %233
    %v235 = vsel %vm105, %v221, 0.0
    %236 = vadd.xlane.f32.xlu0 %v235
    %v237 = vpop.xlane.xlu0 %236
    %v238 = vsel %vm105, %v223, 0.0
    %239 = vadd.xlane.f32.xlu0 %v238
    %v240 = vpop.xlane.xlu0 %239
    %v241 = vsel %vm105, %v225, 0.0
    %242 = vadd.xlane.f32.xlu0 %v241
    %v243 = vpop.xlane.xlu0 %242
    %v244 = vsel %vm105, %v227, 0.0
    %245 = vadd.xlane.f32.xlu0 %v244
    %v246 = vpop.xlane.xlu0 %245
    %v247 = vsel %vm105, %v229, 0.0
    %248 = vadd.xlane.f32.xlu0 %v247
    %v249 = vpop.xlane.xlu0 %248
    %v250 = vsel %vm105, %v231, 0.0
    %251 = vadd.xlane.f32.xlu0 %v250
    %v252 = vpop.xlane.xlu0 %251
    %v253 = vlog2.pop %v234
    %v254 = vmul.f32 %v253, 0.6931472
    %v255 = vlog2.pop %v237
    %v256 = vmul.f32 %v255, 0.6931472
    %v257 = vlog2.pop %v240
    %v258 = vmul.f32 %v257, 0.6931472
    %v259 = vlog2.pop %v243
    %v260 = vmul.f32 %v259, 0.6931472
    %v261 = vlog2.pop %v246
    %v262 = vmul.f32 %v261, 0.6931472
    %v263 = vlog2.pop %v249
    %v264 = vmul.f32 %v263, 0.6931472
    %v265 = vlog2.pop %v252
    %v266 = vmul.f32 %v265, 0.6931472
    %v267 = vsub.f32 %v211, %v254
    %v268 = vsub.f32 %v212, %v256
    %v269 = vsub.f32 %v213, %v258
    %v270 = vsub.f32 %v214, %v260
    %v271 = vsub.f32 %v215, %v262
    %v272 = vsub.f32 %v216, %v264
    %v273 = vsub.f32 %v217, %v266
    %vm274 = vcmp.gt.f32.partialorder %v267, 0.0
    %vm275 = vcmp.gt.f32.partialorder %v268, 0.0
    %vm276 = vcmp.gt.f32.partialorder %v269, 0.0
    %vm277 = vcmp.gt.f32.partialorder %v270, 0.0
    %vm278 = vcmp.gt.f32.partialorder %v271, 0.0
    %vm279 = vcmp.gt.f32.partialorder %v272, 0.0
    %vm280 = vcmp.gt.f32.partialorder %v273, 0.0
    %v281 = vsel %vm274, %v267, 1.0
    %v282 = vsel %vm275, %v268, 1.0
    %v283 = vsel %vm276, %v269, 1.0
    %v284 = vsel %vm277, %v270, 1.0
    %v285 = vsel %vm278, %v271, 1.0
    %v286 = vsel %vm279, %v272, 1.0
    %v287 = vsel %vm280, %v273, 1.0
    %v288 = vlog2.pop %v281
    %v289 = vmul.f32 %v288, 0.6931472
    %v290 = vlog2.pop %v282
    %v291 = vmul.f32 %v290, 0.6931472
    %v292 = vlog2.pop %v283
    %v293 = vmul.f32 %v292, 0.6931472
    %v294 = vlog2.pop %v284
    %v295 = vmul.f32 %v294, 0.6931472
    %v296 = vlog2.pop %v285
    %v297 = vmul.f32 %v296, 0.6931472
    %v298 = vlog2.pop %v286
    %v299 = vmul.f32 %v298, 0.6931472
    %v300 = vlog2.pop %v287
    %v301 = vmul.f32 %v300, 0.6931472
    %v302 = vsub.f32 %v289, %v183
    %v303 = vsub.f32 %v291, %v184
    %v304 = vsub.f32 %v293, %v185
    %v305 = vsub.f32 %v295, %v186
    %v306 = vsub.f32 %v297, %v187
    %v307 = vsub.f32 %v299, %v188
    %v308 = vsub.f32 %v301, %v189
    %v309 = vmul.f32 %v267, %v302
    %v310 = vmul.f32 %v268, %v303
    %v311 = vmul.f32 %v269, %v304
    %v312 = vmul.f32 %v270, %v305
    %v313 = vmul.f32 %v271, %v306
    %v314 = vmul.f32 %v272, %v307
    %v315 = vmul.f32 %v273, %v308
    %v316 = vsel %vm274, %v309, 0.0
    %v317 = vsel %vm275, %v310, 0.0
    %v318 = vsel %vm276, %v311, 0.0
    %v319 = vsel %vm277, %v312, 0.0
    %v320 = vsel %vm278, %v313, 0.0
    %v321 = vsel %vm279, %v314, 0.0
    %v322 = vsel %vm280, %v315, 0.0
    %v323 = vsel %vm105, %v316, 0.0
    %324 = vadd.xlane.f32.xlu0 %v323
    %v325 = vpop.xlane.xlu0 %324
    %v326 = vsel %vm105, %v317, 0.0
    %327 = vadd.xlane.f32.xlu0 %v326
    %v328 = vpop.xlane.xlu0 %327
    %v329 = vsel %vm105, %v318, 0.0
    %330 = vadd.xlane.f32.xlu0 %v329
    %v331 = vpop.xlane.xlu0 %330
    %v332 = vsel %vm105, %v319, 0.0
    %333 = vadd.xlane.f32.xlu0 %v332
    %v334 = vpop.xlane.xlu0 %333
    %v335 = vsel %vm105, %v320, 0.0
    %336 = vadd.xlane.f32.xlu0 %v335
    %v337 = vpop.xlane.xlu0 %336
    %v338 = vsel %vm105, %v321, 0.0
    %339 = vadd.xlane.f32.xlu0 %v338
    %v340 = vpop.xlane.xlu0 %339
    %v341 = vsel %vm105, %v322, 0.0
    %342 = vadd.xlane.f32.xlu0 %v341
    %v343 = vpop.xlane.xlu0 %342
    %v344 = vsel %vm70, %v325, 0.0
    %v345 = vsel %vm71, %v328, 0.0
    %v346 = vsel %vm72, %v331, 0.0
    %v347 = vsel %vm73, %v334, 0.0
    %v348 = vsel %vm74, %v337, 0.0
    %v349 = vsel %vm75, %v340, 0.0
    %v350 = vsel %vm76, %v343, 0.0
    %vm351 = vcmask 7168
    %352 = vst.msk [vmem:[%s2] sm:$0xff] %vm351, %v344
    %353 = vst.msk [vmem:[%s2 + $0x8] sm:$0xff] %vm351, %v345
    %354 = vst.msk [vmem:[%s2 + $0x10] sm:$0xff] %vm351, %v346
    %355 = vst.msk [vmem:[%s2 + $0x18] sm:$0xff] %vm351, %v347
    %356 = vst.msk [vmem:[%s2 + $0x20] sm:$0xff] %vm351, %v348
    %357 = vst.msk [vmem:[%s2 + $0x28] sm:$0xff] %vm351, %v349
    %358 = vst.msk [vmem:[%s2 + $0x30] sm:$0xff] %vm351, %v350
    // Predicated region
    $region18: #{tpu_custom_call.1} parent=1 // pred_check
      _
    $region19: #{tpu_custom_call.1} parent=1 // pred_check_branch
      %360 = sbr.rel (0) target = $region21
    $region20: #{tpu_custom_call.1} parent=1 // pred_region
      _
    $region21: #{tpu_custom_call.1} parent=1 // pred_fallthru
      _
    // Predicated region
    $region22: #{tpu_custom_call.1} parent=1 // pred_check
      _
    $region23: #{tpu_custom_call.1} parent=1 // pred_check_branch
      %362 = sbr.rel (0) target = $region25
    $region24: #{tpu_custom_call.1} parent=1 // pred_region
      _
    $region25: #{tpu_custom_call.1} parent=1 // pred_fallthru
      _
    %363 = vsyncpa [#allocation3], 1
    %364 = vsyncpa [#allocation5], 1

</llo_original>
